<compile_context>
chip_gen: v6e
topology: v6e:2x2x1
jax: 0.10.0
libtpu: 0.0.40
codegen_flags: <defaults>
</compile_context>

<pallas_src>
import functools

import jax
import jax.numpy as jnp
from jax.experimental import pallas as pl
from jax.experimental.pallas import tpu as pltpu

_EPS = 1e-8            # torch.nn.functional.cosine_similarity default eps
_EPS_SQ = _EPS * _EPS  # clamp applied to the squared norm (monotone equivalent)


def _round_up(x, m):
    return (x + m - 1) // m * m


def _clip_hinge_kernel(txt_ref, img_ref, out_ref, *, n_chunks, lane_w):
    """One (row-block i, col-block j) tile of the hinge part of the loss.

    txt_ref: (R, D) pre-normalized text rows   [i*R, (i+1)*R)   (mm dtype)
    img_ref: (C, D) pre-normalized image rows  [j*C, (j+1)*C)   (mm dtype)
    out_ref: (R, lane_w) f32 lane-dense per-row hinge partials for row block i
             (resident across the j / reduction axis).
    """
    j = pl.program_id(1)

    # Initialize the resident accumulator at the start of each j sweep.
    @pl.when(j == 0)
    def _init():
        out_ref[...] = jnp.zeros_like(out_ref)

    # (R, C) cosine-similarity tile on the MXU (inputs are already normalized,
    # contract last dims, f32 accumulation).
    sim = jax.lax.dot_general(
        txt_ref[...], img_ref[...],
        dimension_numbers=(((1,), (1,)), ((), ())),
        preferred_element_type=jnp.float32,
    )

    hinge = jnp.maximum(sim - 0.1, 0.0)           # (R, C) f32, padded cols -> 0

    # Lane-dense partial reduction: fold the C columns into lane_w lanes with
    # static, vreg-aligned slices (pure VPU whole-vreg adds, no XLU reduce).
    acc = hinge[:, 0:lane_w]
    for k in range(1, n_chunks):                   # static, tiny trip count
        acc = acc + hinge[:, k * lane_w:(k + 1) * lane_w]
    out_ref[...] += acc


@functools.partial(jax.jit, static_argnames=("row_tile", "col_tile", "matmul_dtype"))
def clip_loss(image_embeddings, text_embeddings, *, row_tile=1024, col_tile=256,
              matmul_dtype=jnp.bfloat16):
    """image_embeddings: (B, D).  text_embeddings: (B, 1, D) or (B, D).

    Returns the scalar CLIP_Loss of the reference PyTorch module.
    row_tile / col_tile: text-row / image-row block sizes of the sim tile
      (v6e: 1024/256, v7x: 512/256, v5e: 256/128).
    matmul_dtype: dtype fed to the MXU (bf16 default, f32 accumulation).
    """
    img = jnp.asarray(image_embeddings, jnp.float32)
    txt = jnp.asarray(text_embeddings, jnp.float32)
    if txt.ndim == 3:                               # (B, 1, D) as in the module
        txt = jnp.squeeze(txt, axis=1)
    B, D = img.shape
    assert txt.shape == (B, D), (txt.shape, img.shape)

    # ---- Prologue: one fused O(B*D) pass (normalize + diag term + pad + cast).
    inv_t = jax.lax.rsqrt(jnp.maximum(jnp.sum(txt * txt, axis=-1, keepdims=True), _EPS_SQ))
    inv_v = jax.lax.rsqrt(jnp.maximum(jnp.sum(img * img, axis=-1, keepdims=True), _EPS_SQ))
    t_n = txt * inv_t                                # (B, D) f32, unit rows
    v_n = img * inv_v                                # (B, D) f32, unit rows

    # Positive-pair (diagonal) term, computed in f32 outside the tile loop:
    #   0.5 * sum_i (1 - sim[i, i])
    diag_term = 0.5 * (B - jnp.sum(t_n * v_n))

    # ---- Tile geometry (128-aligned when B is large, sublane-aligned otherwise).
    if B >= 128:
        align = 128
    elif matmul_dtype == jnp.bfloat16:
        align = 16                                   # bf16 sublane packing
    else:
        align = 8                                    # f32 sublane
    R = min(_round_up(row_tile, align), _round_up(B, align))   # text rows / block
    C = min(_round_up(col_tile, align), _round_up(B, align))   # image rows / block
    bp_r = _round_up(B, R)
    bp_c = _round_up(B, C)

    # Zero-padded rows/cols contribute nothing (sim == 0 -> relu(-0.1) == 0).
    t_p = jnp.pad(t_n, ((0, bp_r - B), (0, 0))).astype(matmul_dtype)
    v_p = jnp.pad(v_n, ((0, bp_c - B), (0, 0))).astype(matmul_dtype)

    lane_w = 128 if C % 128 == 0 else C              # lane-dense accumulator width
    n_chunks = C // lane_w

    kernel = functools.partial(_clip_hinge_kernel, n_chunks=n_chunks, lane_w=lane_w)

    row_partials = pl.pallas_call(
        kernel,
        out_shape=jax.ShapeDtypeStruct((bp_r, lane_w), jnp.float32),
        grid_spec=pltpu.PrefetchScalarGridSpec(
            num_scalar_prefetch=0,
            grid=(bp_r // R, bp_c // C),             # (row blocks, col blocks=reduction)
            in_specs=[
                # Text block index is constant across j -> fetched once per row block.
                pl.BlockSpec((R, D), lambda i, j: (i, 0)),
                # Image block changes every step; default double-buffering.
                # (Optional further tuning: pipeline_mode=pl.Buffered(3) here.)
                pl.BlockSpec((C, D), lambda i, j: (j, 0)),
            ],
            out_specs=pl.BlockSpec((R, lane_w), lambda i, j: (i, 0)),
        ),
        compiler_params=pltpu.CompilerParams(
            # Row blocks are independent -> parallel (megacore); column axis
            # accumulates into the resident output -> arbitrary, and is last.
            dimension_semantics=("parallel", "arbitrary"),
            # Actual usage at the recommended tiles is ~13 MiB; 48 MiB keeps
            # headroom on every generation including v7x's 64 MiB physical VMEM.
            vmem_limit_bytes=48 * 1024 * 1024,
        ),
    )(t_p, v_p)

    # Final O(B) cross-lane reduce + the single 0.5/B scale.
    return diag_term + (0.5 / B) * jnp.sum(row_partials)


def _clip_loss_ref(image_embeddings, text_embeddings):
    """Pure-JAX reference mirroring the PyTorch forward (sanity check only)."""
    img = jnp.asarray(image_embeddings, jnp.float32)      # (B, D)
    txt = jnp.asarray(text_embeddings, jnp.float32)       # (B, 1, D)
    x1 = txt                                               # (B, 1, D)
    x2 = img[None, :, :]                                   # (1, B, D)
    n1 = jnp.maximum(jnp.linalg.norm(x1, axis=-1), _EPS)
    n2 = jnp.maximum(jnp.linalg.norm(x2, axis=-1), _EPS)
    sim = jnp.sum(x1 * x2, axis=-1) / (n1 * n2)            # (B, B)
    diag = jnp.diagonal(sim).reshape(-1, 1)
    loss = 0.5 * (1.0 - diag) + 0.5 * jnp.maximum(sim - 0.1, 0.0)
    return jnp.sum(loss) / sim.shape[0]


if __name__ == "__main__":
    key = jax.random.PRNGKey(0)
    k_img, k_txt, k_img2, k_txt2 = jax.random.split(key, 4)

    # Multi-tile rectangular path: B=40, R=32, C=16 -> 2x3 grid with both row
    # and column padding, bf16 MXU operands.
    B, D = 40, 64
    image_embeddings = jax.random.normal(k_img, (B, D), dtype=jnp.float32)
    text_embeddings = jax.random.normal(k_txt, (B, 1, D), dtype=jnp.float32)
    ref = _clip_loss_ref(image_embeddings, text_embeddings)

    loss_bf16 = clip_loss(image_embeddings, text_embeddings, row_tile=32, col_tile=16)
    jax.block_until_ready(loss_bf16)
    assert jnp.allclose(loss_bf16, ref, rtol=1e-2, atol=1e-2), (loss_bf16, ref)

    # Same rectangular tiling with f32 MXU operands: tight tolerance vs the ref.
    loss_f32 = clip_loss(image_embeddings, text_embeddings, row_tile=32, col_tile=16,
                         matmul_dtype=jnp.float32)
    jax.block_until_ready(loss_f32)
    assert jnp.allclose(loss_f32, ref, rtol=1e-5, atol=1e-4), (loss_f32, ref)

    # Default-config path (single tile after capping, small batch).
    B2, D2 = 8, 32
    img2 = jax.random.normal(k_img2, (B2, D2), dtype=jnp.float32)
    txt2 = jax.random.normal(k_txt2, (B2, 1, D2), dtype=jnp.float32)
    loss2 = clip_loss(img2, txt2)
    jax.block_until_ready(loss2)
    ref2 = _clip_loss_ref(img2, txt2)
    assert jnp.allclose(loss2, ref2, rtol=1e-2, atol=1e-2), (loss2, ref2)

    print("KERNEL_OK")
</pallas_src>

<mosaic_0001>
module attributes {stable_mosaic.version = 11 : i64} {
  func.func @_clip_hinge_kernel(%arg0: i32, %arg1: i32, %arg2: memref<32x64xbf16, #tpu.memory_space<vmem>>, %arg3: memref<16x64xbf16, #tpu.memory_space<vmem>>, %arg4: memref<32x16xf32, #tpu.memory_space<vmem>>) attributes {dimension_semantics = [#tpu.dimension_semantics<parallel>, #tpu.dimension_semantics<arbitrary>], iteration_bounds = array<i64: 2, 3>, scalar_prefetch = 0 : i64, scratch_operands = 0 : i64, tpu.core_type = #tpu.core_type<tc>, window_params = [{transform_indices = @transform_0, window_bounds = array<i64: 32, 64>}, {transform_indices = @transform_1, window_bounds = array<i64: 16, 64>}, {transform_indices = @transform_2, window_bounds = array<i64: 32, 16>}]} {
    %c0_i32 = arith.constant 0 : i32
    %0 = arith.cmpi eq, %arg1, %c0_i32 : i32
    %1 = arith.extui %0 : i1 to i32
    %c0_i32_0 = arith.constant 0 : i32
    %2 = arith.cmpi ne, %1, %c0_i32_0 : i32
    scf.if %2 {
      %cst_10 = arith.constant 0.000000e+00 : f32
      %13 = vector.broadcast %cst_10 : f32 to vector<32x16xf32>
      %c0_11 = arith.constant 0 : index
      %c0_12 = arith.constant 0 : index
      %14 = vector.load %arg4[%c0_11, %c0_12] : memref<32x16xf32, #tpu.memory_space<vmem>>, vector<32x16xf32>
      tpu.vector_store %arg4[%c0_11, %c0_12], %13 {strides = array<i32>} : memref<32x16xf32, #tpu.memory_space<vmem>>, vector<32x16xf32>,
    } else {
    }
    %c0 = arith.constant 0 : index
    %c0_1 = arith.constant 0 : index
    %3 = vector.load %arg2[%c0, %c0_1] : memref<32x64xbf16, #tpu.memory_space<vmem>>, vector<32x64xbf16>
    %c0_2 = arith.constant 0 : index
    %c0_3 = arith.constant 0 : index
    %4 = vector.load %arg3[%c0_2, %c0_3] : memref<16x64xbf16, #tpu.memory_space<vmem>>, vector<16x64xbf16>
    %cst = arith.constant dense<0.000000e+00> : vector<32x16xf32>
    %5 = tpu.matmul %3, %4, %cst {dimension_numbers = #tpu.dot_dimension_numbers<[1], [1], [0], [0], [0, 0, 1, 0], [], []>} : vector<32x64xbf16>, vector<16x64xbf16>, vector<32x16xf32> -> vector<32x16xf32>
    %cst_4 = arith.constant 1.000000e-01 : f32
    %6 = vector.broadcast %cst_4 : f32 to vector<32x16xf32>
    %7 = arith.subf %5, %6 : vector<32x16xf32>
    %cst_5 = arith.constant 0.000000e+00 : f32
    %8 = vector.broadcast %cst_5 : f32 to vector<32x16xf32>
    %9 = arith.maximumf %7, %8 : vector<32x16xf32>
    %c0_6 = arith.constant 0 : index
    %c0_7 = arith.constant 0 : index
    %10 = vector.load %arg4[%c0_6, %c0_7] : memref<32x16xf32, #tpu.memory_space<vmem>>, vector<32x16xf32>
    %11 = arith.addf %10, %9 : vector<32x16xf32>
    %c0_8 = arith.constant 0 : index
    %c0_9 = arith.constant 0 : index
    %12 = vector.load %arg4[%c0_8, %c0_9] : memref<32x16xf32, #tpu.memory_space<vmem>>, vector<32x16xf32>
    tpu.vector_store %arg4[%c0_8, %c0_9], %11 {strides = array<i32>} : memref<32x16xf32, #tpu.memory_space<vmem>>, vector<32x16xf32>,
    return
  }
  func.func @transform_0(%arg0: i32, %arg1: i32) -> (i32, i32) {
    %c0_i32 = arith.constant 0 : i32
    %c0_i32_0 = arith.constant 0 : i32
    return %arg0, %c0_i32 : i32, i32
  }
  func.func @transform_1(%arg0: i32, %arg1: i32) -> (i32, i32) {
    %c0_i32 = arith.constant 0 : i32
    %c0_i32_0 = arith.constant 0 : i32
    return %arg1, %c0_i32 : i32, i32
  }
  func.func @transform_2(%arg0: i32, %arg1: i32) -> (i32, i32) {
    %c0_i32 = arith.constant 0 : i32
    %c0_i32_0 = arith.constant 0 : i32
    return %arg0, %c0_i32 : i32, i32
  }
}

</mosaic_0001>

<llo_original>
// kernel: clip_loss.1
$region0: #{clip_loss.1}
  #allocation0 [shape = 'u32[]', space=smem, size = 0x4, offset = 0x4, fixed_abs, tag = 'smem constant byte address 0x4 - core index']
  #allocation1 [shape = 'u32[144,128]{1,0:T(1,128)}', space=vmem, size = 0x12000, scoped, tag = 'internal scratch']
  %s0 = inlined_call_operand.vmem [shape: bf16[64,64], index: 0, kind: input, shape index: {}]
  %s1 = inlined_call_operand.vmem [shape: bf16[48,64], index: 1, kind: input, shape index: {}]
  %s2 = inlined_call_operand.vmem [shape: f32[64,16], index: 2, kind: output, shape index: {}]
  %s3 = sld [smem:[#allocation0]]
  $region45: #{clip_loss.1} parent=0
    _
  %s5 = ssub.s32 1, %s3
  %s6 = scalar_select 0, %s5, %s3
  loop: start=0, step=1, limit=8
  $region2: #{clip_loss.1} parent=0 // loop_pre_header
    _
  $region3: #{clip_loss.1} parent=0 // loop_header
    %s8 = sphi 0, %s12
    %p9 = scmp.ge.s32.totalorder %s8, 8
    %s15 = sphi 0, %s27
    %s16 = sphi 0, %s23
    %s17 = sphi 0, %s15
    %s18 = sphi 0, %s16
    %s19 = sphi 0, %s17
    %s20 = sphi 0, %s18
    %s30 = sphi 0, %s32
    %s33 = sphi 0, %s30
    %s34 = sphi 0, %s33
    %s50 = sphi 0, %s34
    %s56 = sphi 0, %s58
    %s59 = sphi 0, %s56
    %s60 = sphi 0, %s59
    %s76 = sphi 0, %s60
    %s82 = sphi 0, %s84
    %s85 = sphi 0, %s82
    %s86 = sphi 0, %s85
    %s102 = sphi 0, %s86
  $region4: #{clip_loss.1} parent=0 // loop_header_branch
    %11 = sbr.rel (%p9) target = $region8
  $region5: #{clip_loss.1} parent=0 // loop_body
    %s13 = ssub.s32 %s8, 1
    %s14 = ssub.s32 %s8, 2
    %s21 = sadd.s32 1, %s16
    %p22 = scmp.ge.s32.totalorder %s21, 3
    %s23 = scalar_select %p22, 0, %s21
    %s24 = sadd.s32 1, %s15
    %s25 = scalar_select %p22, %s24, %s15
    %p26 = scmp.ge.s32.totalorder %s25, 2
    %s27 = scalar_select %p26, 0, %s25
    %s28 = ssub.s32 %s15, %s27
    %p29 = scmp.eq.s32.totalorder %s28, 0
    %s31 = sadd.s32 %s30, 1
    %s32 = scalar_select %p29, %s30, %s31
    %p35 = pneg %p29
    %p36 = scmp.eq.s32.totalorder %s8, 5
    %p37 = por %p35, %p36
    %p38 = scmp.ne.s32.totalorder %s30, %s33
    %p39 = scmp.eq.s32.totalorder %s8, 0
    %p40 = por %p38, %p39
    %p41 = scmp.ne.s32.totalorder %s30, %s33
    %p42 = scmp.eq.s32.totalorder %s13, 5
    %p43 = por %p41, %p42
    %p44 = scmp.ne.s32.totalorder %s33, %s34
    %p45 = scmp.eq.s32.totalorder %s13, 0
    %p46 = por %p44, %p45
    %p47 = scmp.ne.s32.totalorder %s33, %s34
    %p48 = scmp.eq.s32.totalorder %s14, 5
    %p49 = por %p47, %p48
    %p51 = scmp.ne.s32.totalorder %s34, %s50
    %p52 = scmp.eq.s32.totalorder %s14, 0
    %p53 = por %p51, %p52
    %s54 = ssub.s32 %s16, %s23
    %p55 = scmp.eq.s32.totalorder %s54, 0
    %s57 = sadd.s32 %s56, 1
    %s58 = scalar_select %p55, %s56, %s57
    %p61 = pneg %p55
    %p62 = scmp.eq.s32.totalorder %s8, 5
    %p63 = por %p61, %p62
    %p64 = scmp.ne.s32.totalorder %s56, %s59
    %p65 = scmp.eq.s32.totalorder %s8, 0
    %p66 = por %p64, %p65
    %p67 = scmp.ne.s32.totalorder %s56, %s59
    %p68 = scmp.eq.s32.totalorder %s13, 5
    %p69 = por %p67, %p68
    %p70 = scmp.ne.s32.totalorder %s59, %s60
    %p71 = scmp.eq.s32.totalorder %s13, 0
    %p72 = por %p70, %p71
    %p73 = scmp.ne.s32.totalorder %s59, %s60
    %p74 = scmp.eq.s32.totalorder %s14, 5
    %p75 = por %p73, %p74
    %p77 = scmp.ne.s32.totalorder %s60, %s76
    %p78 = scmp.eq.s32.totalorder %s14, 0
    %p79 = por %p77, %p78
    %s80 = ssub.s32 %s15, %s27
    %p81 = scmp.eq.s32.totalorder %s80, 0
    %s83 = sadd.s32 %s82, 1
    %s84 = scalar_select %p81, %s82, %s83
    %p87 = pneg %p81
    %p88 = scmp.eq.s32.totalorder %s8, 5
    %p89 = por %p87, %p88
    %p90 = scmp.ne.s32.totalorder %s82, %s85
    %p91 = scmp.eq.s32.totalorder %s8, 0
    %p92 = por %p90, %p91
    %p93 = scmp.ne.s32.totalorder %s82, %s85
    %p94 = scmp.eq.s32.totalorder %s13, 5
    %p95 = por %p93, %p94
    %p96 = scmp.ne.s32.totalorder %s85, %s86
    %p97 = scmp.eq.s32.totalorder %s13, 0
    %p98 = por %p96, %p97
    %p99 = scmp.ne.s32.totalorder %s85, %s86
    %p100 = scmp.eq.s32.totalorder %s14, 5
    %p101 = por %p99, %p100
    %p103 = scmp.ne.s32.totalorder %s86, %s102
    %p104 = scmp.eq.s32.totalorder %s14, 0
    %p105 = por %p103, %p104
    %p106 = scmp.le.s32.totalorder 1, %s8
    %p107 = scmp.lt.s32.totalorder %s8, 7
    %p108 = pnand %p106, %p107
    %p109 = pneg %p108
    // Predicated region
    $region9: #{clip_loss.1} parent=5 // pred_check
      _
    $region10: #{clip_loss.1} parent=5 // pred_check_branch
      %111 = sbr.rel (%p108) target = $region12
    $region11: #{clip_loss.1} parent=5 // pred_region
      %s112 = ssub.s32 %s8, 1
    $region12: #{clip_loss.1} parent=5 // pred_fallthru
      _
    %p113 = scmp.lt.s32.totalorder %s8, 6
    // Predicated region
    $region13: #{clip_loss.1} parent=5 // pred_check
      %p114 = pneg %p113
    $region14: #{clip_loss.1} parent=5 // pred_check_branch
      %116 = sbr.rel (%p114) target = $region16
    $region15: #{clip_loss.1} parent=5 // pred_region
      // Predicated region
      $region17: #{clip_loss.1} parent=15 // pred_check
        %p117 = pneg %p40
      $region18: #{clip_loss.1} parent=15 // pred_check_branch
        %119 = sbr.rel (%p117) target = $region20
      $region19: #{clip_loss.1} parent=15 // pred_region
        %s120 = smul.u32 4, %s15
        %p121 = scmp.lt.s32.totalorder %s120, 7
        %s122 = scalar_select %p121, %s120, 7
        %s123 = smul.addr %s122, 4
        %s124 = scalar_lea.vmem %s0, %s123
        %s125 = smul.u32 4, %s15
      $region20: #{clip_loss.1} parent=15 // pred_fallthru
        _
      // Predicated region
      $region21: #{clip_loss.1} parent=15 // pred_check
        %p126 = pneg %p66
      $region22: #{clip_loss.1} parent=15 // pred_check_branch
        %128 = sbr.rel (%p126) target = $region24
      $region23: #{clip_loss.1} parent=15 // pred_region
        %s129 = smul.u32 2, %s16
        %p130 = scmp.lt.s32.totalorder %s129, 5
        %s131 = scalar_select %p130, %s129, 5
        %s132 = smul.addr %s131, 4
        %s133 = scalar_lea.vmem %s1, %s132
        %s134 = smul.u32 2, %s16
      $region24: #{clip_loss.1} parent=15 // pred_fallthru
        _
    $region16: #{clip_loss.1} parent=5 // pred_fallthru
      _
    %p135 = scmp.le.s32.totalorder 1, %s8
    %p136 = scmp.lt.s32.totalorder %s8, 7
    %p137 = pnand %p135, %p136
    %p138 = pneg %p137
    // Predicated region
    $region25: #{clip_loss.1} parent=5 // pred_check
      _
    $region26: #{clip_loss.1} parent=5 // pred_check_branch
      %140 = sbr.rel (%p137) target = $region28
    $region27: #{clip_loss.1} parent=5 // pred_region
      %s141 = ssub.s32 %s8, 1
      %s142 = smul.u32 4, %s17
      %p143 = scmp.lt.s32.totalorder %s142, 7
      %s144 = scalar_select %p143, %s142, 7
      %s145 = smul.addr %s144, 4
      %s146 = scalar_lea.vmem %s0, %s145
      %p147 = pneg %p46
      %p148 = pneg %p43
      %s149 = smul.u32 2, %s18
      %p150 = scmp.lt.s32.totalorder %s149, 5
      %s151 = scalar_select %p150, %s149, 5
      %s152 = smul.addr %s151, 4
      %s153 = scalar_lea.vmem %s1, %s152
      %p154 = pneg %p72
      %p155 = pneg %p69
      %p156 = pneg %p98
      %p157 = pneg %p95
      %s158 = smul.u32 4, %s17
      %p159 = scmp.lt.s32.totalorder %s158, 7
      %s160 = scalar_select %p159, %s158, 7
      %s161 = smul.addr %s160, 8
      %s162 = scalar_lea.vmem %s2, %s161
      %s163 = smul.u32 4, %s17
      %p164 = scmp.lt.s32.totalorder %s163, 7
      %s165 = scalar_select %p164, %s163, 7
      %s166 = smul.addr %s165, 4
      %s167 = scalar_lea.vmem %s0, %s166
      %s168 = smul.u32 4, %s17
      %s169 = smul.u32 2, %s18
      %p170 = scmp.lt.s32.totalorder %s169, 5
      %s171 = scalar_select %p170, %s169, 5
      %s172 = smul.addr %s171, 4
      %s173 = scalar_lea.vmem %s1, %s172
      %s174 = smul.u32 2, %s18
      %s175 = smul.u32 4, %s17
      %p176 = scmp.lt.s32.totalorder %s175, 7
      %s177 = scalar_select %p176, %s175, 7
      %s178 = smul.addr %s177, 8
      %s179 = scalar_lea.vmem %s2, %s178
      %s180 = smul.u32 4, %s17
      %p182 = scmp.eq.s32.totalorder %s18, 0
      // Predicated region
      $region29: #{clip_loss.1} parent=27 // pred_check
        %p183 = pneg %p182
      $region30: #{clip_loss.1} parent=27 // pred_check_branch
        %185 = sbr.rel (%p183) target = $region32
      $region31: #{clip_loss.1} parent=27 // pred_region
        %vm186 = vcmask 130048
        %187 = vst.msk [vmem:[%s179] sm:$0xff] %vm186, 0.0
        %188 = vst.msk [vmem:[%s179 + $0x8] sm:$0xff] %vm186, 0.0
        %189 = vst.msk [vmem:[%s179 + $0x10] sm:$0xff] %vm186, 0.0
        %190 = vst.msk [vmem:[%s179 + $0x18] sm:$0xff] %vm186, 0.0
      $region32: #{clip_loss.1} parent=27 // pred_fallthru
        _
      %v191 = vld [vmem:[%s167] sm:$0xf]
      %v192 = vld [vmem:[%s167 + $0x4] sm:$0xf]
      %v193 = vld [vmem:[%s167 + $0x8] sm:$0xf]
      %v194 = vld [vmem:[%s167 + $0xc] sm:$0xf]
      %v195 = vld [vmem:[%s173] sm:$0xf]
      %v196 = vld [vmem:[%s173 + $0x4] sm:$0xf]
      %v201 = vunpack.c.l.b16 %v191
      %v202 = vunpack.c.l.b16 %v192
      %v203 = vunpack.c.l.b16 %v193
      %v204 = vunpack.c.l.b16 %v194
      %v205 = vpack.c.b16 %v202, %v201
      %v206 = vpack.c.b16 %v204, %v203
      %v209 = vunpack.c.l.b16 %v195
      %v210 = vunpack.c.l.b16 %v196
      %v211 = vpack.c.b16 %v210, %v209
      %vm212 = vcmask 523264
      %v214 = vsel %vm212, %v205, 0
      %v217 = vsel %vm212, %v206, 0
      %v220 = vsel %vm212, %v211, 0
      %222 = vmatprep.subr.bf16.mxu0 0
      %223 = vmatpush1.bf16.xpose.msra.mxu0 0
      %224 = vmatprep.subr.bf16.mxu0 0
      %225 = vmatpush1.bf16.xpose.msra.mxu0 0
      %226 = vmatprep.subr.bf16.mxu0 0
      %227 = vmatpush1.bf16.xpose.msra.mxu0 0
      %228 = vmatprep.subr.bf16.mxu0 0
      %229 = vmatpush1.bf16.xpose.msra.mxu0 0
      %230 = vmatprep.subr.bf16.mxu0 0
      %231 = vmatpush1.bf16.xpose.msra.mxu0 0
      %232 = vmatprep.subr.bf16.mxu0 0
      %233 = vmatpush1.bf16.xpose.msra.mxu0 0
      %234 = vmatprep.subr.bf16.mxu0 0
      %235 = vmatpush1.bf16.xpose.msra.mxu0 0
      %236 = vmatprep.subr.bf16.mxu0 0
      %237 = vmatpush1.bf16.xpose.msra.mxu0 %v220
      %238 = vmatprep.subr.bf16.mxu0 0
      %239 = vmatpush2.bf16.xpose.msra.mxu0 0
      %240 = vmatprep.subr.bf16.mxu0 0
      %241 = vmatpush2.bf16.xpose.msra.mxu0 0
      %242 = vmatprep.subr.bf16.mxu0 0
      %243 = vmatpush2.bf16.xpose.msra.mxu0 0
      %244 = vmatprep.subr.bf16.mxu0 0
      %245 = vmatpush2.bf16.xpose.msra.mxu0 0
      %246 = vmatprep.subr.bf16.mxu0 0
      %247 = vmatpush2.bf16.xpose.msra.mxu0 0
      %248 = vmatprep.subr.bf16.mxu0 0
      %249 = vmatpush2.bf16.xpose.msra.mxu0 0
      %250 = vmatprep.subr.bf16.mxu0 0
      %251 = vmatpush2.bf16.xpose.msra.mxu0 0
      %252 = vmatprep.subr.bf16.mxu0 0
      %253 = vmatpush2.bf16.xpose.msra.mxu0 0
      %254 = vmatprep.mubr.bf16.mxu0 0
      %255 = vmatmul.mubr.bf16.gmra.mxu0 %v214
      %v256 = vpop.f32.mrf.mxu0
      %v257 = vadd.f32 0.0, %v256
      %v258 = vpop.f32.mrf.mxu0
      %v259 = vpop.f32.mrf.mxu0
      %v260 = vadd.f32 0.0, %v259
      %v261 = vpop.f32.mrf.mxu0
      %262 = vmatprep.mubr.bf16.mxu0 0
      %263 = vmatmul.mubr.bf16.gmra.mxu0 %v217
      %v264 = vpop.f32.mrf.mxu0
      %v265 = vadd.f32 0.0, %v264
      %v266 = vpop.f32.mrf.mxu0
      %v267 = vpop.f32.mrf.mxu0
      %v268 = vadd.f32 0.0, %v267
      %v269 = vpop.f32.mrf.mxu0
      %270 = vdwg.mxu0
      %v271 = vsub.f32 %v257, 0.1
      %v272 = vsub.f32 %v260, 0.1
      %v273 = vsub.f32 %v265, 0.1
      %v274 = vsub.f32 %v268, 0.1
      %v275 = vmax.f32 %v271, 0.0
      %v276 = vmax.f32 %v272, 0.0
      %v277 = vmax.f32 %v273, 0.0
      %v278 = vmax.f32 %v274, 0.0
      %v279 = vld [vmem:[%s179] sm:$0xff]
      %v280 = vld [vmem:[%s179 + $0x8] sm:$0xff]
      %v281 = vld [vmem:[%s179 + $0x10] sm:$0xff]
      %v282 = vld [vmem:[%s179 + $0x18] sm:$0xff]
      %v283 = vadd.f32 %v279, %v275
      %v284 = vadd.f32 %v280, %v276
      %v285 = vadd.f32 %v281, %v277
      %v286 = vadd.f32 %v282, %v278
      %vm287 = vcmask 130048
      %288 = vst.msk [vmem:[%s179] sm:$0xff] %vm287, %v283
      %289 = vst.msk [vmem:[%s179 + $0x8] sm:$0xff] %vm287, %v284
      %290 = vst.msk [vmem:[%s179 + $0x10] sm:$0xff] %vm287, %v285
      %291 = vst.msk [vmem:[%s179 + $0x18] sm:$0xff] %vm287, %v286
      %s292 = smul.u32 4, %s17
      %p293 = scmp.lt.s32.totalorder %s292, 7
      %s294 = scalar_select %p293, %s292, 7
      %s295 = smul.addr %s294, 8
      %s296 = scalar_lea.vmem %s2, %s295
      // Predicated region
      $region33: #{clip_loss.1} parent=27 // pred_check
        %p297 = pneg %p95
      $region34: #{clip_loss.1} parent=27 // pred_check_branch
        %299 = sbr.rel (%p297) target = $region36
      $region35: #{clip_loss.1} parent=27 // pred_region
        %s300 = smul.u32 4, %s17
      $region36: #{clip_loss.1} parent=27 // pred_fallthru
        _
    $region28: #{clip_loss.1} parent=5 // pred_fallthru
      _
    %p301 = scmp.le.s32.totalorder 2, %s8
    // Predicated region
    $region37: #{clip_loss.1} parent=5 // pred_check
      %p302 = pneg %p301
    $region38: #{clip_loss.1} parent=5 // pred_check_branch
      %304 = sbr.rel (%p302) target = $region40
    $region39: #{clip_loss.1} parent=5 // pred_region
      %s305 = ssub.s32 %s8, 2
      // Predicated region
      $region41: #{clip_loss.1} parent=39 // pred_check
        %p306 = pneg %p101
      $region42: #{clip_loss.1} parent=39 // pred_check_branch
        %308 = sbr.rel (%p306) target = $region44
      $region43: #{clip_loss.1} parent=39 // pred_region
        %s309 = smul.u32 4, %s19
        %p310 = scmp.lt.s32.totalorder %s309, 7
        %s311 = scalar_select %p310, %s309, 7
        %s312 = smul.addr %s311, 8
        %s313 = scalar_lea.vmem %s2, %s312
      $region44: #{clip_loss.1} parent=39 // pred_fallthru
        _
    $region40: #{clip_loss.1} parent=5 // pred_fallthru
      _
  $region6: #{clip_loss.1} parent=0 // loop_footer
    %s12 = sadd.s32 1, %s8
  $region7: #{clip_loss.1} parent=0 // loop_footer_branch
    %7 = sbr.rel target = $region3
  $region8: #{clip_loss.1} parent=0 // loop_exit
    _

</llo_original>
